<compile_context>
chip_gen: v5e
topology: v5e:2x2
jax: 0.10.0
libtpu: 0.0.40
codegen_flags: <defaults>
</compile_context>

<pallas_src>
import jax
import jax.numpy as jnp
from jax.experimental import pallas as pl
from jax.experimental.pallas import tpu as pltpu

_LANE = 128
_SUBLANE = 8
_GROUP = _SUBLANE * _LANE  # 1024 elements = one (8,128) f32 vreg


def _make_dice_kernel(groups_last):
    """Build the per-sample streaming reduction kernel.

    groups_last: number of valid (8,128) groups in the final S tile, or None
    if every S tile is fully valid (static, resolved at trace time).
    """

    def kernel(x_ref, t_ref, o_ref):
        # x_ref, t_ref: (1, g_tile, 8, 128) input tiles (native dtype).
        # o_ref:        (1, 2, 8, 128) f32 resident accumulator
        #               ([0] = sum x*t partials, [1] = sum (x+t) partials).
        s = pl.program_id(1)
        ns = pl.num_programs(1)

        @pl.when(s == 0)
        def _init():
            o_ref[...] = jnp.zeros_like(o_ref)

        def _accumulate(masked):
            x = x_ref[0].astype(jnp.float32)          # (g_tile, 8, 128)
            t = t_ref[0].astype(jnp.float32)
            if masked:
                # Static mask for the ragged last tile (OOB groups hold junk).
                gid = jax.lax.broadcasted_iota(jnp.int32, x.shape, 0)
                keep = gid < groups_last
                x = jnp.where(keep, x, 0.0)
                t = jnp.where(keep, t, 0.0)
            # Fold the tile down to one (8,128) slab per stream with pure
            # vreg-wise VPU adds (no cross-lane work), then accumulate into
            # the vreg-sized resident output block.
            o_ref[0, 0] += jnp.sum(x * t, axis=0)
            o_ref[0, 1] += jnp.sum(x + t, axis=0)

        if groups_last is None:
            _accumulate(False)
        else:
            @pl.when(s < ns - 1)
            def _steady():
                _accumulate(False)

            @pl.when(s == ns - 1)
            def _ragged():
                _accumulate(True)

    return kernel


def dice_loss(inp, tgt, *, row_tile=None):
    """DiceLoss.forward as a Pallas TPU kernel.

    inp, tgt: arrays whose leading dim is the batch N; everything else is
    flattened (matching `input.view(N, -1)`).  `row_tile` is the number of
    128-lane rows streamed per grid step (rounded to groups of 8); by default
    it is picked per wire dtype (4096 for f32 inputs, 8192 for <=2-byte).
    """
    if inp.shape[0] != tgt.shape[0]:
        raise ValueError("input and target must share the batch dimension")
    N = inp.shape[0]

    # Flatten per-sample features; keep the native dtype on the wire.
    x = inp.reshape(N, -1)
    t = tgt.reshape(N, -1)
    S = x.shape[1]

    # Pad only to the (8,128) group boundary, and only when needed.  Zero
    # padding is exact for both sums; the aligned case copies nothing.
    s_pad = -(-S // _GROUP) * _GROUP
    if s_pad != S:
        x = jnp.pad(x, ((0, 0), (0, s_pad - S)))
        t = jnp.pad(t, ((0, 0), (0, s_pad - S)))
    groups = s_pad // _GROUP
    x = x.reshape(N, groups, _SUBLANE, _LANE)
    t = t.reshape(N, groups, _SUBLANE, _LANE)

    # Tile size in (8,128) groups.  Double-buffered inputs at the defaults use
    # ~8 MiB of VMEM (scratch no longer scales with the tile).
    if row_tile is None:
        wire_bytes = (jnp.dtype(inp.dtype).itemsize
                      + jnp.dtype(tgt.dtype).itemsize)
        row_tile = 8192 if wire_bytes <= 4 else 4096
    g_tile = max(1, min(int(row_tile) // _SUBLANE, groups))
    num_s_tiles = -(-groups // g_tile)
    groups_last = groups - (num_s_tiles - 1) * g_tile
    kernel = _make_dice_kernel(None if groups_last == g_tile else groups_last)

    in_bytes = N * s_pad * (jnp.dtype(x.dtype).itemsize
                            + jnp.dtype(t.dtype).itemsize)
    cost = pl.CostEstimate(
        flops=4 * N * s_pad,
        transcendentals=0,
        bytes_accessed=in_bytes + N * 2 * _SUBLANE * _LANE * 4,
    )

    partials = pl.pallas_call(
        kernel,
        out_shape=jax.ShapeDtypeStruct((N, 2, _SUBLANE, _LANE), jnp.float32),
        grid_spec=pltpu.PrefetchScalarGridSpec(
            num_scalar_prefetch=0,
            grid=(N, num_s_tiles),
            in_specs=[
                pl.BlockSpec((1, g_tile, _SUBLANE, _LANE),
                             lambda n, s: (n, s, 0, 0)),
                pl.BlockSpec((1, g_tile, _SUBLANE, _LANE),
                             lambda n, s: (n, s, 0, 0)),
            ],
            out_specs=pl.BlockSpec((1, 2, _SUBLANE, _LANE),
                                   lambda n, s: (n, 0, 0, 0)),
        ),
        compiler_params=pltpu.CompilerParams(
            dimension_semantics=("parallel", "arbitrary"),
            # Safe on every generation (<= half of v7x's 64 MiB physical VMEM);
            # the default tiles use only ~8 MiB of it.
            vmem_limit_bytes=32 * 1024 * 1024,
        ),
        cost_estimate=cost,
    )(x, t)                                                   # (N, 2, 8, 128)

    # Tiny O(N) epilogue in plain JAX: final lane/sublane reduce + ratio.
    sums = jnp.sum(partials, axis=(2, 3))                     # (N, 2) float32
    inter, denom = sums[:, 0], sums[:, 1]                     # denom = x_sum + t_sum
    smooth = jnp.float32(1.0)
    ratio = (2.0 * inter + smooth) / (denom + smooth)
    return 1.0 - jnp.sum(ratio) / N


def _reference(inp, tgt):
    """Pure-JAX port of the PyTorch DiceLoss.forward (for verification)."""
    N = tgt.shape[0]
    xf = inp.reshape(N, -1).astype(jnp.float32)
    tf = tgt.reshape(N, -1).astype(jnp.float32)
    inter = jnp.sum(xf * tf, axis=1)
    ratio = (2.0 * inter + 1.0) / (jnp.sum(xf, axis=1) + jnp.sum(tf, axis=1) + 1.0)
    return 1.0 - jnp.sum(ratio) / N


if __name__ == "__main__":
    key = jax.random.PRNGKey(0)
    k1, k2, k3, k4, k5, k6 = jax.random.split(key, 6)

    # Case 1: small NCHW shapes implied by the module (batch=2, channels=4, 16x16).
    # S = 1024 -> one aligned group tile, no padding, no masking.
    N, C, H, W = 2, 4, 16, 16
    probs = jax.nn.sigmoid(jax.random.normal(k1, (N, C, H, W), dtype=jnp.float32))
    target = (jax.random.uniform(k2, (N, C, H, W)) > 0.5).astype(jnp.float32)
    loss = jax.block_until_ready(dice_loss(probs, target))
    ref = jax.block_until_ready(_reference(probs, target))
    assert jnp.allclose(loss, ref, rtol=1e-5, atol=1e-6), (loss, ref)

    # Case 2: multi-tile accumulation + group padding + ragged last tile mask
    # + bf16 on the wire (upcast happens inside the kernel).
    # S = 4*32*41 = 5248 -> 6 groups; row_tile=32 -> g_tile=4 -> tiles of 4,2.
    N2, C2, H2, W2 = 2, 4, 32, 41
    probs2 = jax.nn.sigmoid(
        jax.random.normal(k3, (N2, C2, H2, W2), dtype=jnp.float32)
    ).astype(jnp.bfloat16)
    target2 = (jax.random.uniform(k4, (N2, C2, H2, W2)) > 0.5).astype(jnp.bfloat16)
    loss2 = jax.block_until_ready(dice_loss(probs2, target2, row_tile=32))
    ref2 = jax.block_until_ready(_reference(probs2, target2))
    assert jnp.allclose(loss2, ref2, rtol=1e-5, atol=1e-5), (loss2, ref2)

    # Case 3: N=1, unaligned S, default (dtype-aware) tile size with clamping.
    N3, C3, H3, W3 = 1, 3, 16, 24                 # S = 1152 -> padded to 2048
    probs3 = jax.nn.sigmoid(jax.random.normal(k5, (N3, C3, H3, W3), dtype=jnp.float32))
    target3 = (jax.random.uniform(k6, (N3, C3, H3, W3)) > 0.5).astype(jnp.float32)
    loss3 = jax.block_until_ready(dice_loss(probs3, target3))
    ref3 = jax.block_until_ready(_reference(probs3, target3))
    assert jnp.allclose(loss3, ref3, rtol=1e-5, atol=1e-6), (loss3, ref3)

    print("KERNEL_OK")
</pallas_src>

<mosaic_0001>
module attributes {stable_mosaic.version = 11 : i64} {
  func.func @kernel(%arg0: i32, %arg1: i32, %arg2: memref<1x1x8x128xf32, #tpu.memory_space<vmem>>, %arg3: memref<1x1x8x128xf32, #tpu.memory_space<vmem>>, %arg4: memref<1x2x8x128xf32, #tpu.memory_space<vmem>>) attributes {dimension_semantics = [#tpu.dimension_semantics<parallel>, #tpu.dimension_semantics<arbitrary>], iteration_bounds = array<i64: 2, 1>, scalar_prefetch = 0 : i64, scratch_operands = 0 : i64, tpu.core_type = #tpu.core_type<tc>, window_params = [{transform_indices = @transform_0, window_bounds = array<i64: 1, 1, 8, 128>}, {transform_indices = @transform_1, window_bounds = array<i64: 1, 1, 8, 128>}, {transform_indices = @transform_2, window_bounds = array<i64: 1, 2, 8, 128>}]} {
    %c0_i32 = arith.constant 0 : i32
    %0 = arith.cmpi eq, %arg1, %c0_i32 : i32
    %1 = arith.extui %0 : i1 to i32
    %c0_i32_0 = arith.constant 0 : i32
    %2 = arith.cmpi ne, %1, %c0_i32_0 : i32
    scf.if %2 {
      %cst_24 = arith.constant 0.000000e+00 : f32
      %23 = vector.broadcast %cst_24 : f32 to vector<1x2x8x128xf32>
      %c0_25 = arith.constant 0 : index
      %c0_26 = arith.constant 0 : index
      %c0_27 = arith.constant 0 : index
      %c0_28 = arith.constant 0 : index
      %24 = vector.load %arg4[%c0_25, %c0_26, %c0_27, %c0_28] : memref<1x2x8x128xf32, #tpu.memory_space<vmem>>, vector<1x2x8x128xf32>
      tpu.vector_store %arg4[%c0_25, %c0_26, %c0_27, %c0_28], %23 {strides = array<i32>} : memref<1x2x8x128xf32, #tpu.memory_space<vmem>>, vector<1x2x8x128xf32>,
    } else {
    }
    %c0 = arith.constant 0 : index
    %c0_1 = arith.constant 0 : index
    %c0_2 = arith.constant 0 : index
    %c0_3 = arith.constant 0 : index
    %3 = vector.load %arg2[%c0, %c0_1, %c0_2, %c0_3] : memref<1x1x8x128xf32, #tpu.memory_space<vmem>>, vector<1x1x8x128xf32>
    %4 = vector.shape_cast %3 : vector<1x1x8x128xf32> to vector<1x8x128xf32>
    %c0_4 = arith.constant 0 : index
    %c0_5 = arith.constant 0 : index
    %c0_6 = arith.constant 0 : index
    %c0_7 = arith.constant 0 : index
    %5 = vector.load %arg3[%c0_4, %c0_5, %c0_6, %c0_7] : memref<1x1x8x128xf32, #tpu.memory_space<vmem>>, vector<1x1x8x128xf32>
    %6 = vector.shape_cast %5 : vector<1x1x8x128xf32> to vector<1x8x128xf32>
    %c0_8 = arith.constant 0 : index
    %c0_9 = arith.constant 0 : index
    %c0_10 = arith.constant 0 : index
    %c0_11 = arith.constant 0 : index
    %7 = vector.load %arg4[%c0_8, %c0_9, %c0_10, %c0_11] : memref<1x2x8x128xf32, #tpu.memory_space<vmem>>, vector<1x1x8x128xf32>
    %8 = vector.shape_cast %7 : vector<1x1x8x128xf32> to vector<8x128xf32>
    %9 = arith.mulf %4, %6 : vector<1x8x128xf32>
    %cst = arith.constant dense<0.000000e+00> : vector<8x128xf32>
    %10 = vector.multi_reduction <add>, %9, %cst [0] : vector<1x8x128xf32> to vector<8x128xf32>
    %11 = arith.addf %8, %10 : vector<8x128xf32>
    %c0_12 = arith.constant 0 : index
    %c0_13 = arith.constant 0 : index
    %c0_14 = arith.constant 0 : index
    %c0_15 = arith.constant 0 : index
    %12 = vector.load %arg4[%c0_12, %c0_13, %c0_14, %c0_15] : memref<1x2x8x128xf32, #tpu.memory_space<vmem>>, vector<1x1x8x128xf32>
    %13 = vector.shape_cast %12 : vector<1x1x8x128xf32> to vector<8x128xf32>
    %14 = vector.shape_cast %11 : vector<8x128xf32> to vector<1x1x8x128xf32>
    tpu.vector_store %arg4[%c0_12, %c0_13, %c0_14, %c0_15], %14 {strides = array<i32>} : memref<1x2x8x128xf32, #tpu.memory_space<vmem>>, vector<1x1x8x128xf32>,
    %c0_16 = arith.constant 0 : index
    %c1 = arith.constant 1 : index
    %c0_17 = arith.constant 0 : index
    %c0_18 = arith.constant 0 : index
    %15 = vector.load %arg4[%c0_16, %c1, %c0_17, %c0_18] : memref<1x2x8x128xf32, #tpu.memory_space<vmem>>, vector<1x1x8x128xf32>
    %16 = vector.shape_cast %15 : vector<1x1x8x128xf32> to vector<8x128xf32>
    %17 = arith.addf %4, %6 : vector<1x8x128xf32>
    %cst_19 = arith.constant dense<0.000000e+00> : vector<8x128xf32>
    %18 = vector.multi_reduction <add>, %17, %cst_19 [0] : vector<1x8x128xf32> to vector<8x128xf32>
    %19 = arith.addf %16, %18 : vector<8x128xf32>
    %c0_20 = arith.constant 0 : index
    %c1_21 = arith.constant 1 : index
    %c0_22 = arith.constant 0 : index
    %c0_23 = arith.constant 0 : index
    %20 = vector.load %arg4[%c0_20, %c1_21, %c0_22, %c0_23] : memref<1x2x8x128xf32, #tpu.memory_space<vmem>>, vector<1x1x8x128xf32>
    %21 = vector.shape_cast %20 : vector<1x1x8x128xf32> to vector<8x128xf32>
    %22 = vector.shape_cast %19 : vector<8x128xf32> to vector<1x1x8x128xf32>
    tpu.vector_store %arg4[%c0_20, %c1_21, %c0_22, %c0_23], %22 {strides = array<i32>} : memref<1x2x8x128xf32, #tpu.memory_space<vmem>>, vector<1x1x8x128xf32>,
    return
  }
  func.func @transform_0(%arg0: i32, %arg1: i32) -> (i32, i32, i32, i32) {
    %c0_i32 = arith.constant 0 : i32
    %c0_i32_0 = arith.constant 0 : i32
    %c0_i32_1 = arith.constant 0 : i32
    return %arg0, %arg1, %c0_i32, %c0_i32_0 : i32, i32, i32, i32
  }
  func.func @transform_1(%arg0: i32, %arg1: i32) -> (i32, i32, i32, i32) {
    %c0_i32 = arith.constant 0 : i32
    %c0_i32_0 = arith.constant 0 : i32
    %c0_i32_1 = arith.constant 0 : i32
    return %arg0, %arg1, %c0_i32, %c0_i32_0 : i32, i32, i32, i32
  }
  func.func @transform_2(%arg0: i32, %arg1: i32) -> (i32, i32, i32, i32) {
    %c0_i32 = arith.constant 0 : i32
    %c0_i32_0 = arith.constant 0 : i32
    %c0_i32_1 = arith.constant 0 : i32
    %c0_i32_2 = arith.constant 0 : i32
    return %arg0, %c0_i32, %c0_i32_0, %c0_i32_1 : i32, i32, i32, i32
  }
}

</mosaic_0001>

<llo_original>
// kernel: tpu_custom_call.1
$region0: #{tpu_custom_call.1}
  #allocation0 [shape = 'u32[]', space=smem, size = 0x4, offset = 0x4, fixed_abs, tag = 'smem constant byte address 0x4 - core index']
  #allocation1 [shape = 'u32[72,128]{1,0:T(1,128)}', space=vmem, size = 0x9000, scoped, tag = 'internal scratch']
  %s0 = inlined_call_operand.hbm [shape: f32[2,1,8,128], index: 0, kind: input, shape index: {}]
  %s1 = inlined_call_operand.hbm [shape: f32[2,1,8,128], index: 1, kind: input, shape index: {}]
  %s2 = inlined_call_operand.hbm [shape: f32[2,2,8,128], index: 2, kind: output, shape index: {}]
  %s3 = sld [smem:[#allocation0]]
  $region53: #{tpu_custom_call.1} parent=0
    _
  %s5 = ssub.s32 1, %s3
  %s6 = scalar_select 0, %s5, %s3
  $region1: #{tpu_custom_call.1} parent=0
    #allocation2 [shape = 'u8[8192]{0}', space=vmem, size = 0x2000, scoped, tag = 'input window, operand 0']
    #allocation3 [shape = 's32[2]{0}', space=sflag, size = 0x8, scoped, tag = 'scoped memory for tpu_custom_call.1']
    #allocation4 [shape = 's32[2]{0}', space=sflag, size = 0x8, scoped, tag = 'scoped memory for tpu_custom_call.1']
    #allocation5 [shape = 'u8[8192]{0}', space=vmem, size = 0x2000, scoped, tag = 'input window, operand 1']
    #allocation6 [shape = 's32[2]{0}', space=sflag, size = 0x8, scoped, tag = 'scoped memory for tpu_custom_call.1']
    #allocation7 [shape = 'u8[16384]{0}', space=vmem, size = 0x4000, scoped, tag = 'output window, operand 0']
    %7 = vsyncpa [#allocation3], 0
    %s8 = scalar_lea.sflag [#allocation3], 1
    %9 = vsyncpa %s8, 0
    %10 = vsyncpa [#allocation6], 0
    %s11 = scalar_lea.sflag [#allocation6], 1
    %12 = vsyncpa %s11, 0
    %13 = vsyncpa [#allocation4], 0
    %s14 = scalar_lea.sflag [#allocation4], 1
    %15 = vsyncpa %s14, 0
    loop: start=0, step=1, limit=4
    $region2: #{tpu_custom_call.1} parent=1 // loop_pre_header
      _
    $region3: #{tpu_custom_call.1} parent=1 // loop_header
      %s17 = sphi 0, %s21
      %p18 = scmp.ge.s32.totalorder %s17, 4
      %s24 = sphi 0, %s36
      %s25 = sphi 0, %s32
      %s26 = sphi 0, %s24
      %s27 = sphi 0, %s25
      %s28 = sphi 0, %s26
      %s29 = sphi 0, %s27
      %s41 = sphi 0, %s43
      %s44 = sphi 0, %s41
      %s45 = sphi 0, %s44
      %s61 = sphi 0, %s45
      %s69 = sphi 0, %s71
      %s72 = sphi 0, %s69
      %s73 = sphi 0, %s72
      %s89 = sphi 0, %s73
      %s95 = sphi 0, %s97
      %s98 = sphi 0, %s95
      %s99 = sphi 0, %s98
      %s115 = sphi 0, %s99
    $region4: #{tpu_custom_call.1} parent=1 // loop_header_branch
      %20 = sbr.rel (%p18) target = $region8
    $region5: #{tpu_custom_call.1} parent=1 // loop_body
      %s22 = ssub.s32 %s17, 1
      %s23 = ssub.s32 %s17, 2
      %s30 = sadd.s32 1, %s25
      %p31 = scmp.ge.s32.totalorder %s30, 1
      %s32 = scalar_select %p31, 0, %s30
      %s33 = sadd.s32 1, %s24
      %s34 = scalar_select %p31, %s33, %s24
      %p35 = scmp.ge.s32.totalorder %s34, 2
      %s36 = scalar_select %p35, 0, %s34
      %s37 = ssub.s32 %s24, %s36
      %s38 = ssub.s32 %s25, %s32
      %s39 = sor.u32 %s37, %s38
      %p40 = scmp.eq.s32.totalorder %s39, 0
      %s42 = sadd.s32 %s41, 1
      %s43 = scalar_select %p40, %s41, %s42
      %p46 = pneg %p40
      %p47 = scmp.eq.s32.totalorder %s17, 1
      %p48 = por %p46, %p47
      %p49 = scmp.ne.s32.totalorder %s41, %s44
      %p50 = scmp.eq.s32.totalorder %s17, 0
      %p51 = por %p49, %p50
      %p52 = scmp.ne.s32.totalorder %s41, %s44
      %p53 = scmp.eq.s32.totalorder %s22, 1
      %p54 = por %p52, %p53
      %p55 = scmp.ne.s32.totalorder %s44, %s45
      %p56 = scmp.eq.s32.totalorder %s22, 0
      %p57 = por %p55, %p56
      %p58 = scmp.ne.s32.totalorder %s44, %s45
      %p59 = scmp.eq.s32.totalorder %s23, 1
      %p60 = por %p58, %p59
      %p62 = scmp.ne.s32.totalorder %s45, %s61
      %p63 = scmp.eq.s32.totalorder %s23, 0
      %p64 = por %p62, %p63
      %s65 = ssub.s32 %s24, %s36
      %s66 = ssub.s32 %s25, %s32
      %s67 = sor.u32 %s65, %s66
      %p68 = scmp.eq.s32.totalorder %s67, 0
      %s70 = sadd.s32 %s69, 1
      %s71 = scalar_select %p68, %s69, %s70
      %p74 = pneg %p68
      %p75 = scmp.eq.s32.totalorder %s17, 1
      %p76 = por %p74, %p75
      %p77 = scmp.ne.s32.totalorder %s69, %s72
      %p78 = scmp.eq.s32.totalorder %s17, 0
      %p79 = por %p77, %p78
      %p80 = scmp.ne.s32.totalorder %s69, %s72
      %p81 = scmp.eq.s32.totalorder %s22, 1
      %p82 = por %p80, %p81
      %p83 = scmp.ne.s32.totalorder %s72, %s73
      %p84 = scmp.eq.s32.totalorder %s22, 0
      %p85 = por %p83, %p84
      %p86 = scmp.ne.s32.totalorder %s72, %s73
      %p87 = scmp.eq.s32.totalorder %s23, 1
      %p88 = por %p86, %p87
      %p90 = scmp.ne.s32.totalorder %s73, %s89
      %p91 = scmp.eq.s32.totalorder %s23, 0
      %p92 = por %p90, %p91
      %s93 = ssub.s32 %s24, %s36
      %p94 = scmp.eq.s32.totalorder %s93, 0
      %s96 = sadd.s32 %s95, 1
      %s97 = scalar_select %p94, %s95, %s96
      %p100 = pneg %p94
      %p101 = scmp.eq.s32.totalorder %s17, 1
      %p102 = por %p100, %p101
      %p103 = scmp.ne.s32.totalorder %s95, %s98
      %p104 = scmp.eq.s32.totalorder %s17, 0
      %p105 = por %p103, %p104
      %p106 = scmp.ne.s32.totalorder %s95, %s98
      %p107 = scmp.eq.s32.totalorder %s22, 1
      %p108 = por %p106, %p107
      %p109 = scmp.ne.s32.totalorder %s98, %s99
      %p110 = scmp.eq.s32.totalorder %s22, 0
      %p111 = por %p109, %p110
      %p112 = scmp.ne.s32.totalorder %s98, %s99
      %p113 = scmp.eq.s32.totalorder %s23, 1
      %p114 = por %p112, %p113
      %p116 = scmp.ne.s32.totalorder %s99, %s115
      %p117 = scmp.eq.s32.totalorder %s23, 0
      %p118 = por %p116, %p117
      %p119 = scmp.le.s32.totalorder 1, %s17
      %p120 = scmp.lt.s32.totalorder %s17, 3
      %p121 = pnand %p119, %p120
      %p122 = pneg %p121
      // Predicated region
      $region9: #{tpu_custom_call.1} parent=5 // pred_check
        _
      $region10: #{tpu_custom_call.1} parent=5 // pred_check_branch
        %124 = sbr.rel (%p121) target = $region12
      $region11: #{tpu_custom_call.1} parent=5 // pred_region
        %s125 = ssub.s32 %s17, 1
      $region12: #{tpu_custom_call.1} parent=5 // pred_fallthru
        _
      %p126 = scmp.lt.s32.totalorder %s17, 2
      // Predicated region
      $region13: #{tpu_custom_call.1} parent=5 // pred_check
        %p127 = pneg %p126
      $region14: #{tpu_custom_call.1} parent=5 // pred_check_branch
        %129 = sbr.rel (%p127) target = $region16
      $region15: #{tpu_custom_call.1} parent=5 // pred_region
        // Predicated region
        $region17: #{tpu_custom_call.1} parent=15 // pred_check
          %p130 = pneg %p51
        $region18: #{tpu_custom_call.1} parent=15 // pred_check_branch
          %132 = sbr.rel (%p130) target = $region20
        $region19: #{tpu_custom_call.1} parent=15 // pred_region
          %s133 = sand.u32 %s41, 1
          %s134 = scalar_lea.sflag [#allocation3], %s133
          %s135 = sand.u32 %s41, 1
          %s136 = smul.addr %s135, 8
          %s137 = scalar_lea.vmem [#allocation2], %s136
          %139 = vsyncadd %s134, 0
          %s140 = sadd.s32 %s25, %s24
          %s141 = smul.addr %s140, 8
          %s142 = scalar_lea.hbm %s0, %s141
          %s144 = sshll.u32 %s142, 4
          %s145 = int_to_ptr.hbm [resolvable:$true] %s144
          %s146 = sshll.u32 %s137, 4
          %s147 = int_to_ptr.vmem [resolvable:$true] %s146
          %149 = dma.hbm_to_vmem [thread:$0]  %s145, 128, %s147, %s134
        $region20: #{tpu_custom_call.1} parent=15 // pred_fallthru
          _
        // Predicated region
        $region21: #{tpu_custom_call.1} parent=15 // pred_check
          %p150 = pneg %p79
        $region22: #{tpu_custom_call.1} parent=15 // pred_check_branch
          %152 = sbr.rel (%p150) target = $region24
        $region23: #{tpu_custom_call.1} parent=15 // pred_region
          %s153 = sand.u32 %s69, 1
          %s154 = scalar_lea.sflag [#allocation6], %s153
          %s155 = sand.u32 %s69, 1
          %s156 = smul.addr %s155, 8
          %s157 = scalar_lea.vmem [#allocation5], %s156
          %159 = vsyncadd %s154, 0
          %s160 = sadd.s32 %s25, %s24
          %s161 = smul.addr %s160, 8
          %s162 = scalar_lea.hbm %s1, %s161
          %s164 = sshll.u32 %s162, 4
          %s165 = int_to_ptr.hbm [resolvable:$true] %s164
          %s166 = sshll.u32 %s157, 4
          %s167 = int_to_ptr.vmem [resolvable:$true] %s166
          %169 = dma.hbm_to_vmem [thread:$0]  %s165, 128, %s167, %s154
        $region24: #{tpu_custom_call.1} parent=15 // pred_fallthru
          _
      $region16: #{tpu_custom_call.1} parent=5 // pred_fallthru
        _
      %p170 = scmp.le.s32.totalorder 1, %s17
      %p171 = scmp.lt.s32.totalorder %s17, 3
      %p172 = pnand %p170, %p171
      %p173 = pneg %p172
      // Predicated region
      $region25: #{tpu_custom_call.1} parent=5 // pred_check
        _
      $region26: #{tpu_custom_call.1} parent=5 // pred_check_branch
        %175 = sbr.rel (%p172) target = $region28
      $region27: #{tpu_custom_call.1} parent=5 // pred_region
        %s176 = ssub.s32 %s17, 1
        %s177 = sand.u32 %s44, 1
        %s178 = scalar_lea.sflag [#allocation3], %s177
        %s179 = sand.u32 %s44, 1
        %s180 = smul.addr %s179, 8
        %s181 = scalar_lea.vmem [#allocation2], %s180
        // Predicated region
        $region29: #{tpu_custom_call.1} parent=27 // pred_check
          %p182 = pneg %p57
        $region30: #{tpu_custom_call.1} parent=27 // pred_check_branch
          %184 = sbr.rel (%p182) target = $region32
        $region31: #{tpu_custom_call.1} parent=27 // pred_region
          %186 = dma.done %s178, 128
        $region32: #{tpu_custom_call.1} parent=27 // pred_fallthru
          _
        %s187 = sand.u32 %s72, 1
        %s188 = scalar_lea.sflag [#allocation6], %s187
        %s189 = sand.u32 %s72, 1
        %s190 = smul.addr %s189, 8
        %s191 = scalar_lea.vmem [#allocation5], %s190
        // Predicated region
        $region33: #{tpu_custom_call.1} parent=27 // pred_check
          %p192 = pneg %p85
        $region34: #{tpu_custom_call.1} parent=27 // pred_check_branch
          %194 = sbr.rel (%p192) target = $region36
        $region35: #{tpu_custom_call.1} parent=27 // pred_region
          %196 = dma.done %s188, 128
        $region36: #{tpu_custom_call.1} parent=27 // pred_fallthru
          _
        %s197 = sand.u32 %s44, 1
        %s198 = scalar_lea.sflag [#allocation3], %s197
        %s199 = sand.u32 %s44, 1
        %s200 = smul.addr %s199, 8
        %s201 = scalar_lea.vmem [#allocation2], %s200
        %p202 = pneg %p57
        %p203 = pneg %p54
        %s204 = sand.u32 %s72, 1
        %s205 = scalar_lea.sflag [#allocation6], %s204
        %s206 = sand.u32 %s72, 1
        %s207 = smul.addr %s206, 8
        %s208 = scalar_lea.vmem [#allocation5], %s207
        %p209 = pneg %p85
        %p210 = pneg %p82
        %p211 = pneg %p111
        %p212 = pneg %p108
        %s213 = sand.u32 %s98, 1
        %s214 = scalar_lea.sflag [#allocation4], %s213
        %s215 = sand.u32 %s98, 1
        %s216 = smul.addr %s215, 16
        %s217 = scalar_lea.vmem [#allocation7], %s216
        %p218 = scmp.eq.s32.totalorder %s27, 0
        // Predicated region
        $region37: #{tpu_custom_call.1} parent=27 // pred_check
          %p219 = pneg %p218
        $region38: #{tpu_custom_call.1} parent=27 // pred_check_branch
          %221 = sbr.rel (%p219) target = $region40
        $region39: #{tpu_custom_call.1} parent=27 // pred_region
          %222 = vst [vmem:[%s217] sm:$0xff] 0.0
          %223 = vst [vmem:[%s217 + $0x8] sm:$0xff] 0.0
        $region40: #{tpu_custom_call.1} parent=27 // pred_fallthru
          _
        %v224 = vld [vmem:[%s181] sm:$0xff]
        %v225 = vld [vmem:[%s191] sm:$0xff]
        %v226 = vld [vmem:[%s217] sm:$0xff]
        %v227 = vmul.f32 %v224, %v225
        %v228 = vadd.f32 %v227, 0.0
        %v229 = vadd.f32 %v226, %v228
        %230 = vst [vmem:[%s217] sm:$0xff] %v229
        %s231 = scalar_lea.vmem %s217, 8 [#allocation7]
        %v232 = vld [vmem:[%s231] sm:$0xff]
        %v233 = vadd.f32 %v224, %v225
        %v234 = vadd.f32 %v233, 0.0
        %v235 = vadd.f32 %v232, %v234
        %236 = vst [vmem:[%s231] sm:$0xff] %v235
        %s237 = sand.u32 %s98, 1
        %s238 = scalar_lea.sflag [#allocation4], %s237
        %s239 = sand.u32 %s98, 1
        %s240 = smul.addr %s239, 16
        %s241 = scalar_lea.vmem [#allocation7], %s240
        // Predicated region
        $region41: #{tpu_custom_call.1} parent=27 // pred_check
          %p242 = pneg %p108
        $region42: #{tpu_custom_call.1} parent=27 // pred_check_branch
          %244 = sbr.rel (%p242) target = $region44
        $region43: #{tpu_custom_call.1} parent=27 // pred_region
          %246 = vsyncadd %s238, 0
          %s247 = smul.addr %s26, 2
          %s248 = smul.addr %s247, 8
          %s249 = scalar_lea.hbm %s2, %s248
          %s250 = sshll.u32 %s241, 4
          %s251 = int_to_ptr.vmem [resolvable:$true] %s250
          %s252 = sshll.u32 %s249, 4
          %s253 = int_to_ptr.hbm [resolvable:$true] %s252
          %258 = dma.vmem_to_hbm [thread:$0]  %s251, 256, %s253, %s238, 128, 128, 8
        $region44: #{tpu_custom_call.1} parent=27 // pred_fallthru
          _
      $region28: #{tpu_custom_call.1} parent=5 // pred_fallthru
        _
      %p259 = scmp.le.s32.totalorder 2, %s17
      // Predicated region
      $region45: #{tpu_custom_call.1} parent=5 // pred_check
        %p260 = pneg %p259
      $region46: #{tpu_custom_call.1} parent=5 // pred_check_branch
        %262 = sbr.rel (%p260) target = $region48
      $region47: #{tpu_custom_call.1} parent=5 // pred_region
        %s263 = ssub.s32 %s17, 2
        // Predicated region
        $region49: #{tpu_custom_call.1} parent=47 // pred_check
          %p264 = pneg %p114
        $region50: #{tpu_custom_call.1} parent=47 // pred_check_branch
          %266 = sbr.rel (%p264) target = $region52
        $region51: #{tpu_custom_call.1} parent=47 // pred_region
          %s267 = sand.u32 %s99, 1
          %s268 = scalar_lea.sflag [#allocation4], %s267
          %s269 = sand.u32 %s99, 1
          %s270 = smul.addr %s269, 16
          %s271 = scalar_lea.vmem [#allocation7], %s270
          %273 = dma.done %s268, 256
        $region52: #{tpu_custom_call.1} parent=47 // pred_fallthru
          _
      $region48: #{tpu_custom_call.1} parent=5 // pred_fallthru
        _
    $region6: #{tpu_custom_call.1} parent=1 // loop_footer
      %s21 = sadd.s32 1, %s17
    $region7: #{tpu_custom_call.1} parent=1 // loop_footer_branch
      %16 = sbr.rel target = $region3
    $region8: #{tpu_custom_call.1} parent=1 // loop_exit
      _
    %274 = vsyncpa [#allocation3], 1
    %s275 = scalar_lea.sflag [#allocation3], 1
    %276 = vsyncpa %s275, 1
    %277 = vsyncpa [#allocation6], 1
    %s278 = scalar_lea.sflag [#allocation6], 1
    %279 = vsyncpa %s278, 1
    %280 = vsyncpa [#allocation4], 1
    %s281 = scalar_lea.sflag [#allocation4], 1
    %282 = vsyncpa %s281, 1

</llo_original>
